<compile_context>
chip_gen: v5e
topology: v5e:2x2
jax: 0.10.0
libtpu: 0.0.40
codegen_flags: <defaults>
</compile_context>

<pallas_src>
import math
from functools import partial

import numpy as np
import jax
import jax.numpy as jnp
from jax import lax
from jax.experimental import pallas as pl
from jax.experimental.pallas import tpu as pltpu

# small synthetic config (DistilBERT-style block scaled down)
SEQ = 8
HIDDEN = 32
NUM_HEADS = 4
HEAD_DIM = HIDDEN // NUM_HEADS
INTERMEDIATE = 64
EPS = 1e-12
VEC_ROWS = 8
VEC_W = 128          # bias/LayerNorm slab padded to a full 128-lane row
NEG_BIG = 1e9        # additive bias that knocks cross-sequence scores out of softmax


def _layer_norm(x, w, b, eps):
    mean = jnp.mean(x, axis=-1, keepdims=True)
    var = jnp.mean((x - mean) ** 2, axis=-1, keepdims=True)
    return (x - mean) * lax.rsqrt(var + eps) * w + b


def _gelu_exact(x):
    # torch.nn.functional.gelu default = exact erf form
    return 0.5 * x * (1.0 + lax.erf(x * (1.0 / math.sqrt(2.0))))


def _make_kernel(b_blk):
    """Kernel for one grid step processing b_blk folded sequences."""
    S, D, H, Dh, I = SEQ, HIDDEN, NUM_HEADS, HEAD_DIM, INTERMEDIATE
    R = b_blk * S          # folded rows, batch-major: row r = b*S + i
    HR = H * R             # score columns:          col = h*R + b'*S + j

    def kernel(x_ref, wqkv_ref, wd_ref, wf_ref, wfo_ref, vecs_ref,
               selk_ref, selv_ref, seg_ref, cross_ref, out_ref, attn_ref):
        x = x_ref[0].reshape(R, D)                     # (b_blk,S,D) -> (R,D)

        # packed bias / LayerNorm vectors (one 8x128 slab)
        bqkv = vecs_ref[0:1, 0:3 * D]
        bf = vecs_ref[1:2, 0:I]
        bd = vecs_ref[2:3, 0:D]
        bfo = vecs_ref[3:4, 0:D]
        ln1w = vecs_ref[4:5, 0:D]
        ln1b = vecs_ref[5:6, 0:D]
        ln2w = vecs_ref[6:7, 0:D]
        ln2b = vecs_ref[7:8, 0:D]

        # fused Q/K/V projection for every folded sequence; 1/sqrt(Dh) is already
        # folded into the q columns of wqkv/bqkv by the wrapper.
        qkv = jnp.dot(x, wqkv_ref[...], preferred_element_type=jnp.float32) + bqkv
        q = qkv[:, 0:D]
        k = qkv[:, D:2 * D]
        v = qkv[:, 2 * D:3 * D]

        # All heads x all folded sequences with one matmul: replicate K along the
        # lane axis and apply the precomputed head-selection mask (no per-step
        # iota/compare/select).  scores[r, h*R + r'] = <q_h[r], k_h[r']>.
        k_blk = jnp.concatenate([k.T] * H, axis=1) * selk_ref[...]          # (D, HR)
        scores = jnp.dot(q, k_blk, preferred_element_type=jnp.float32)      # (R, HR)

        # Suppress cross-sequence positions, then per-(sequence, head) softmax.
        cross = cross_ref[...]                                              # 1.0 where r and col
        scores = scores - cross * NEG_BIG                                   # belong to different seqs
        m = jnp.max(scores, axis=-1, keepdims=True)                         # row max (valid cols only)
        e = jnp.exp(scores - m)                                             # cross-seq -> exactly 0
        # segment sums via one matmul against the precomputed 0/1 segment matrix;
        # "+ cross" keeps masked segments' denominators at 1 (avoids 0 * inf).
        denom = jnp.dot(e, seg_ref[...], preferred_element_type=jnp.float32) + cross
        w = e * pl.reciprocal(denom, approx=True)                           # (R, HR)
        attn_ref[0] = w                                                     # lane-dense store

        # context lands directly in head-major "unshape" layout.
        v_blk = jnp.concatenate([v] * H, axis=0) * selv_ref[...]            # (HR, D)
        context = jnp.dot(w, v_blk, preferred_element_type=jnp.float32)     # (R, D)

        # ---- DistilSelfOutput.pforward (train_mode=False -> no dropout) ----
        hidden = jnp.dot(context, wd_ref[...], preferred_element_type=jnp.float32) + bd
        hidden = _layer_norm(hidden + x, ln1w, ln1b, EPS)
        f = _gelu_exact(jnp.dot(hidden, wf_ref[...], preferred_element_type=jnp.float32) + bf)
        ffn = jnp.dot(f, wfo_ref[...], preferred_element_type=jnp.float32) + bfo
        out = _layer_norm(ffn + hidden, ln2w, ln2b, EPS)

        # lane-dense output slab (S, b_blk*D): per-sequence row blocks side by
        # side on the lane axis (unpacked in the wrapper -- layout plumbing only).
        out_ref[0] = jnp.concatenate(
            [out[b * S:(b + 1) * S, :] for b in range(b_blk)], axis=1)

    return kernel


def _make_masks(b_blk):
    """Precomputed constant masks (hoisted out of the kernel body)."""
    S, D, H, Dh = SEQ, HIDDEN, NUM_HEADS, HEAD_DIM
    R = b_blk * S
    HR = H * R
    col = np.arange(HR)
    h_col = col // R                    # head of a score column
    b_col = (col % R) // S              # sequence of a score column
    b_row = np.arange(R) // S           # sequence of a score row
    c = np.arange(D)
    selk = (c[:, None] // Dh == h_col[None, :]).astype(np.float32)         # (D, HR)
    selv = np.ascontiguousarray(selk.T)                                    # (HR, D)
    seg = (col[:, None] // S == col[None, :] // S).astype(np.float32)      # (HR, HR)
    cross = (b_row[:, None] != b_col[None, :]).astype(np.float32)          # (R, HR)
    return jnp.asarray(selk), jnp.asarray(selv), jnp.asarray(seg), jnp.asarray(cross)


def _p_param(p, gamma):
    # make_p_layer gamma rule: param + gamma * clamp(param, min=0)
    return p + gamma * jnp.maximum(p, 0.0)


def pack_params(params, gamma=0.0):
    """Parameter packing hoisted out of the hot path: call once per (params, gamma)."""
    scale = 1.0 / math.sqrt(HEAD_DIM)
    wq, bq = _p_param(params["wq"], gamma), _p_param(params["bq"], gamma)
    wk, bk = _p_param(params["wk"], gamma), _p_param(params["bk"], gamma)
    wv, bv = _p_param(params["wv"], gamma), _p_param(params["bv"], gamma)
    wd, bd = _p_param(params["wd"], gamma), _p_param(params["bd"], gamma)

    # fused (D, 3D) QKV weight; q columns pre-scaled by 1/sqrt(head_dim)
    wqkv = jnp.concatenate([wq.T * scale, wk.T, wv.T], axis=1).astype(jnp.float32)
    bqkv = jnp.concatenate([bq * scale, bk, bv], axis=0).astype(jnp.float32)

    def row(vec):
        vec = vec.astype(jnp.float32)
        return jnp.pad(vec, (0, VEC_W - vec.shape[0]))

    vecs = jnp.stack([row(bqkv), row(params["bf"]), row(bd), row(params["bfo"]),
                      row(params["ln1w"]), row(params["ln1b"]),
                      row(params["ln2w"]), row(params["ln2b"])])          # (8, 128)

    return dict(wqkv=wqkv,
                wd=wd.T.astype(jnp.float32),
                wf=params["wf"].T.astype(jnp.float32),
                wfo=params["wfo"].T.astype(jnp.float32),
                vecs=vecs)


@partial(jax.jit, static_argnames=("num_blocks",))
def _forward(hidden_states, packed, num_blocks):
    B = hidden_states.shape[0]
    S, D, H = SEQ, HIDDEN, NUM_HEADS
    G = num_blocks
    Bb = -(-B // G)               # sequences folded per grid step
    B_pad = G * Bb
    R = Bb * S
    HR = H * R

    x = hidden_states.astype(jnp.float32)
    if B_pad != B:
        x = jnp.concatenate([x, jnp.zeros((B_pad - B, S, D), jnp.float32)], axis=0)
    x_blocks = x.reshape(G, Bb, S, D)

    selk, selv, seg, cross = _make_masks(Bb)
    kernel = _make_kernel(Bb)

    out_slab, attn_flat = pl.pallas_call(
        kernel,
        grid=(G,),
        out_shape=(
            jax.ShapeDtypeStruct((G, S, Bb * D), jnp.float32),
            jax.ShapeDtypeStruct((G, R, HR), jnp.float32),
        ),
        in_specs=[
            pl.BlockSpec((1, Bb, S, D), lambda g: (g, 0, 0, 0)),
            pl.BlockSpec((D, 3 * D), lambda g: (0, 0)),
            pl.BlockSpec((D, D), lambda g: (0, 0)),
            pl.BlockSpec((D, INTERMEDIATE), lambda g: (0, 0)),
            pl.BlockSpec((INTERMEDIATE, D), lambda g: (0, 0)),
            pl.BlockSpec((VEC_ROWS, VEC_W), lambda g: (0, 0)),
            pl.BlockSpec((D, HR), lambda g: (0, 0)),
            pl.BlockSpec((HR, D), lambda g: (0, 0)),
            pl.BlockSpec((HR, HR), lambda g: (0, 0)),
            pl.BlockSpec((R, HR), lambda g: (0, 0)),
        ],
        out_specs=(
            pl.BlockSpec((1, S, Bb * D), lambda g: (g, 0, 0)),
            pl.BlockSpec((1, R, HR), lambda g: (g, 0, 0)),
        ),
        compiler_params=pltpu.CompilerParams(
            dimension_semantics=("parallel",)),
    )(x_blocks, packed["wqkv"], packed["wd"], packed["wf"], packed["wfo"],
      packed["vecs"], selk, selv, seg, cross)

    # unpack lane-dense slabs back to module layouts (pure layout plumbing)
    out = (out_slab.reshape(G, S, Bb, D).transpose(0, 2, 1, 3)
           .reshape(B_pad, S, D)[:B])
    attn6 = attn_flat.reshape(G, Bb, S, H, Bb, S)            # (g, b, i, h, b', j)
    attn = jnp.diagonal(attn6, axis1=1, axis2=4)             # (g, i, h, j, b)
    attn = attn.transpose(0, 4, 2, 1, 3).reshape(B_pad, H, S, S)[:B]
    return out, attn


def _default_num_blocks(B):
    if B < 2:
        return 1
    try:
        kind = jax.devices()[0].device_kind.lower()
    except Exception:
        kind = ""
    # chips with 2 TensorCores (megacore: v4 / v5p / v7x): keep 2 parallel grid
    # steps so both cores get work; single-core chips fold everything into 1 step.
    if any(t in kind for t in ("v4", "v5p", "v7")):
        return 2
    return 1


def distil_attention_block(hidden_states, packed, num_blocks=None):
    """hidden_states: (B, SEQ, HIDDEN). Returns (ffn_output (B,S,D), weights (B,H,S,S))."""
    if num_blocks is None:
        num_blocks = _default_num_blocks(hidden_states.shape[0])
    return _forward(hidden_states, packed, num_blocks)


def reference(hidden_states, params, gamma=0.0):
    """Plain-JAX reference mirroring the PyTorch forward exactly (batch=1 slab)."""
    x = hidden_states[0].astype(jnp.float32)
    lin = lambda a, w, b: a @ w.T + b
    q = lin(x, _p_param(params["wq"], gamma), _p_param(params["bq"], gamma))
    k = lin(x, _p_param(params["wk"], gamma), _p_param(params["bk"], gamma))
    v = lin(x, _p_param(params["wv"], gamma), _p_param(params["bv"], gamma))
    shape = lambda t: t.reshape(SEQ, NUM_HEADS, HEAD_DIM).transpose(1, 0, 2)
    qh, kh, vh = shape(q) / math.sqrt(HEAD_DIM), shape(k), shape(v)
    scores = jnp.einsum("hqd,hkd->hqk", qh, kh)
    weights = jax.nn.softmax(scores, axis=-1)
    ctx = jnp.einsum("hqk,hkd->hqd", weights, vh).transpose(1, 0, 2).reshape(SEQ, HIDDEN)
    hidden = lin(ctx, _p_param(params["wd"], gamma), _p_param(params["bd"], gamma))
    hidden = _layer_norm(hidden + x, params["ln1w"], params["ln1b"], EPS)
    f = _gelu_exact(lin(hidden, params["wf"], params["bf"]))
    ffn_out = lin(f, params["wfo"], params["bfo"])
    out = _layer_norm(ffn_out + hidden, params["ln2w"], params["ln2b"], EPS)
    return out[None], weights[None]


def init_params(key):
    ks = jax.random.split(key, 12)
    def w(k, o, i): return jax.random.normal(k, (o, i), jnp.float32) * 0.05
    def b(k, o):    return jax.random.normal(k, (o,), jnp.float32) * 0.02
    return dict(
        wq=w(ks[0], HIDDEN, HIDDEN), bq=b(ks[1], HIDDEN),
        wk=w(ks[2], HIDDEN, HIDDEN), bk=b(ks[3], HIDDEN),
        wv=w(ks[4], HIDDEN, HIDDEN), bv=b(ks[5], HIDDEN),
        wd=w(ks[6], HIDDEN, HIDDEN), bd=b(ks[7], HIDDEN),
        wf=w(ks[8], INTERMEDIATE, HIDDEN), bf=b(ks[9], INTERMEDIATE),
        wfo=w(ks[10], HIDDEN, INTERMEDIATE), bfo=b(ks[11], HIDDEN),
        ln1w=jnp.ones((HIDDEN,), jnp.float32), ln1b=jnp.zeros((HIDDEN,), jnp.float32),
        ln2w=jnp.ones((HIDDEN,), jnp.float32), ln2b=jnp.zeros((HIDDEN,), jnp.float32),
    )


if __name__ == "__main__":
    key = jax.random.PRNGKey(0)
    k_x, k_p, k_xb = jax.random.split(key, 3)
    params = init_params(k_p)

    # module-faithful case: batch = 1 (DistilAttentionBlock hard-codes bs=1)
    hidden_states = jax.random.normal(k_x, (1, SEQ, HIDDEN), jnp.float32)
    for gamma in (0.0, 0.02):
        packed = pack_params(params, gamma=gamma)            # hoisted packing
        out, attn = distil_attention_block(hidden_states, packed)
        out = jax.block_until_ready(out)
        attn = jax.block_until_ready(attn)
        ref_out, ref_attn = reference(hidden_states, params, gamma=gamma)
        assert out.shape == (1, SEQ, HIDDEN) and attn.shape == (1, NUM_HEADS, SEQ, SEQ)
        assert jnp.allclose(out, ref_out, atol=2e-3, rtol=2e-3)
        assert jnp.allclose(attn, ref_attn, atol=2e-3, rtol=2e-3)

    # batched case: 8 independent sequences folded into 1 (v5e/v6e) or 2 (megacore)
    # grid steps; every MXU matmul now sees 32+ rows.
    packed0 = pack_params(params, gamma=0.0)
    xb = jax.random.normal(k_xb, (8, SEQ, HIDDEN), jnp.float32)
    out_b, attn_b = distil_attention_block(xb, packed0)
    out_b = jax.block_until_ready(out_b)
    attn_b = jax.block_until_ready(attn_b)
    for b in range(xb.shape[0]):
        r_out, r_attn = reference(xb[b:b + 1], params, gamma=0.0)
        assert jnp.allclose(out_b[b:b + 1], r_out, atol=2e-3, rtol=2e-3)
        assert jnp.allclose(attn_b[b:b + 1], r_attn, atol=2e-3, rtol=2e-3)

    # explicit single-step (v5e/v6e-style) path and a ragged batch that needs padding
    r3o = jnp.concatenate([reference(xb[b:b + 1], params, 0.0)[0] for b in range(3)])
    r3a = jnp.concatenate([reference(xb[b:b + 1], params, 0.0)[1] for b in range(3)])
    out_s, attn_s = distil_attention_block(xb[:3], packed0, num_blocks=1)
    jax.block_until_ready(out_s)
    assert jnp.allclose(out_s, r3o, atol=2e-3, rtol=2e-3)
    assert jnp.allclose(attn_s, r3a, atol=2e-3, rtol=2e-3)
    out_p, attn_p = distil_attention_block(xb[:3], packed0, num_blocks=2)   # B_pad=4
    jax.block_until_ready(out_p)
    assert jnp.allclose(out_p, r3o, atol=2e-3, rtol=2e-3)
    assert jnp.allclose(attn_p, r3a, atol=2e-3, rtol=2e-3)

    print("KERNEL_OK")
</pallas_src>

<mosaic_0001>
module attributes {stable_mosaic.version = 11 : i64} {
  func.func @kernel(%arg0: i32, %arg1: memref<1x1x8x32xf32, #tpu.memory_space<vmem>>, %arg2: memref<32x96xf32, #tpu.memory_space<vmem>>, %arg3: memref<32x32xf32, #tpu.memory_space<vmem>>, %arg4: memref<32x64xf32, #tpu.memory_space<vmem>>, %arg5: memref<64x32xf32, #tpu.memory_space<vmem>>, %arg6: memref<8x128xf32, #tpu.memory_space<vmem>>, %arg7: memref<32x32xf32, #tpu.memory_space<vmem>>, %arg8: memref<32x32xf32, #tpu.memory_space<vmem>>, %arg9: memref<32x32xf32, #tpu.memory_space<vmem>>, %arg10: memref<8x32xf32, #tpu.memory_space<vmem>>, %arg11: memref<1x8x32xf32, #tpu.memory_space<vmem>>, %arg12: memref<1x8x32xf32, #tpu.memory_space<vmem>>) attributes {dimension_semantics = [#tpu.dimension_semantics<parallel>], iteration_bounds = array<i64: 1>, scalar_prefetch = 0 : i64, scratch_operands = 0 : i64, tpu.core_type = #tpu.core_type<tc>, window_params = [{transform_indices = @transform_0, window_bounds = array<i64: 1, 1, 8, 32>}, {pipeline_mode = #tpu.pipeline_mode<synchronous>, transform_indices = @transform_1, window_bounds = array<i64: 32, 96>}, {pipeline_mode = #tpu.pipeline_mode<synchronous>, transform_indices = @transform_2, window_bounds = array<i64: 32, 32>}, {pipeline_mode = #tpu.pipeline_mode<synchronous>, transform_indices = @transform_3, window_bounds = array<i64: 32, 64>}, {pipeline_mode = #tpu.pipeline_mode<synchronous>, transform_indices = @transform_4, window_bounds = array<i64: 64, 32>}, {pipeline_mode = #tpu.pipeline_mode<synchronous>, transform_indices = @transform_5, window_bounds = array<i64: 8, 128>}, {pipeline_mode = #tpu.pipeline_mode<synchronous>, transform_indices = @transform_6, window_bounds = array<i64: 32, 32>}, {pipeline_mode = #tpu.pipeline_mode<synchronous>, transform_indices = @transform_7, window_bounds = array<i64: 32, 32>}, {pipeline_mode = #tpu.pipeline_mode<synchronous>, transform_indices = @transform_8, window_bounds = array<i64: 32, 32>}, {pipeline_mode = #tpu.pipeline_mode<synchronous>, transform_indices = @transform_9, window_bounds = array<i64: 8, 32>}, {transform_indices = @transform_10, window_bounds = array<i64: 1, 8, 32>}, {transform_indices = @transform_11, window_bounds = array<i64: 1, 8, 32>}]} {
    %c0 = arith.constant 0 : index
    %c0_0 = arith.constant 0 : index
    %c0_1 = arith.constant 0 : index
    %c0_2 = arith.constant 0 : index
    %0 = vector.load %arg1[%c0, %c0_0, %c0_1, %c0_2] : memref<1x1x8x32xf32, #tpu.memory_space<vmem>>, vector<1x1x8x32xf32>
    %1 = vector.shape_cast %0 : vector<1x1x8x32xf32> to vector<1x8x32xf32>
    %2 = vector.shape_cast %1 : vector<1x8x32xf32> to vector<8x32xf32>
    %c0_3 = arith.constant 0 : index
    %c0_4 = arith.constant 0 : index
    %3 = vector.load %arg6[%c0_3, %c0_4] : memref<8x128xf32, #tpu.memory_space<vmem>>, vector<1x96xf32>
    %c1 = arith.constant 1 : index
    %c0_5 = arith.constant 0 : index
    %4 = vector.load %arg6[%c1, %c0_5] : memref<8x128xf32, #tpu.memory_space<vmem>>, vector<1x64xf32>
    %c2 = arith.constant 2 : index
    %c0_6 = arith.constant 0 : index
    %5 = vector.load %arg6[%c2, %c0_6] : memref<8x128xf32, #tpu.memory_space<vmem>>, vector<1x32xf32>
    %c3 = arith.constant 3 : index
    %c0_7 = arith.constant 0 : index
    %6 = vector.load %arg6[%c3, %c0_7] : memref<8x128xf32, #tpu.memory_space<vmem>>, vector<1x32xf32>
    %c4 = arith.constant 4 : index
    %c0_8 = arith.constant 0 : index
    %7 = vector.load %arg6[%c4, %c0_8] : memref<8x128xf32, #tpu.memory_space<vmem>>, vector<1x32xf32>
    %c5 = arith.constant 5 : index
    %c0_9 = arith.constant 0 : index
    %8 = vector.load %arg6[%c5, %c0_9] : memref<8x128xf32, #tpu.memory_space<vmem>>, vector<1x32xf32>
    %c6 = arith.constant 6 : index
    %c0_10 = arith.constant 0 : index
    %9 = vector.load %arg6[%c6, %c0_10] : memref<8x128xf32, #tpu.memory_space<vmem>>, vector<1x32xf32>
    %c7 = arith.constant 7 : index
    %c0_11 = arith.constant 0 : index
    %10 = vector.load %arg6[%c7, %c0_11] : memref<8x128xf32, #tpu.memory_space<vmem>>, vector<1x32xf32>
    %c0_12 = arith.constant 0 : index
    %c0_13 = arith.constant 0 : index
    %11 = vector.load %arg2[%c0_12, %c0_13] : memref<32x96xf32, #tpu.memory_space<vmem>>, vector<32x96xf32>
    %cst = arith.constant dense<0.000000e+00> : vector<8x96xf32>
    %12 = tpu.matmul %2, %11, %cst {dimension_numbers = #tpu.dot_dimension_numbers<[1], [0], [0], [1], [0, 0, 1, 1], [], []>} : vector<8x32xf32>, vector<32x96xf32>, vector<8x96xf32> -> vector<8x96xf32>
    %13 = vector.broadcast %3 : vector<1x96xf32> to vector<8x96xf32>
    %14 = arith.addf %12, %13 : vector<8x96xf32>
    %15 = vector.extract_strided_slice %14 {offsets = [0, 0], sizes = [8, 32], strides = [1, 1]} : vector<8x96xf32> to vector<8x32xf32>
    %16 = vector.extract_strided_slice %14 {offsets = [0, 32], sizes = [8, 32], strides = [1, 1]} : vector<8x96xf32> to vector<8x32xf32>
    %17 = vector.extract_strided_slice %14 {offsets = [0, 64], sizes = [8, 32], strides = [1, 1]} : vector<8x96xf32> to vector<8x32xf32>
    %18 = tpu.transpose %16, [1, 0] : vector<8x32xf32> -> vector<32x8xf32>
    %19 = tpu.concatenate %18, %18, %18, %18 in 1 : vector<32x8xf32>, vector<32x8xf32>, vector<32x8xf32>, vector<32x8xf32> -> vector<32x32xf32>
    %c0_14 = arith.constant 0 : index
    %c0_15 = arith.constant 0 : index
    %20 = vector.load %arg7[%c0_14, %c0_15] : memref<32x32xf32, #tpu.memory_space<vmem>>, vector<32x32xf32>
    %21 = arith.mulf %19, %20 : vector<32x32xf32>
    %cst_16 = arith.constant dense<0.000000e+00> : vector<8x32xf32>
    %22 = tpu.matmul %15, %21, %cst_16 {dimension_numbers = #tpu.dot_dimension_numbers<[1], [0], [0], [1], [0, 0, 1, 1], [], []>} : vector<8x32xf32>, vector<32x32xf32>, vector<8x32xf32> -> vector<8x32xf32>
    %c0_17 = arith.constant 0 : index
    %c0_18 = arith.constant 0 : index
    %23 = vector.load %arg10[%c0_17, %c0_18] : memref<8x32xf32, #tpu.memory_space<vmem>>, vector<8x32xf32>
    %cst_19 = arith.constant 1.000000e+09 : f32
    %24 = vector.broadcast %cst_19 : f32 to vector<8x32xf32>
    %25 = arith.mulf %23, %24 : vector<8x32xf32>
    %26 = arith.subf %22, %25 : vector<8x32xf32>
    %cst_20 = arith.constant dense<0xFF800000> : vector<8xf32>
    %27 = vector.multi_reduction <maximumf>, %26, %cst_20 [1] : vector<8x32xf32> to vector<8xf32>
    %28 = vector.shape_cast %27 : vector<8xf32> to vector<8x1xf32>
    %29 = vector.broadcast %28 : vector<8x1xf32> to vector<8x32xf32>
    %30 = arith.subf %26, %29 : vector<8x32xf32>
    %31 = math.exp %30 : vector<8x32xf32>
    %c0_21 = arith.constant 0 : index
    %c0_22 = arith.constant 0 : index
    %32 = vector.load %arg9[%c0_21, %c0_22] : memref<32x32xf32, #tpu.memory_space<vmem>>, vector<32x32xf32>
    %cst_23 = arith.constant dense<0.000000e+00> : vector<8x32xf32>
    %33 = tpu.matmul %31, %32, %cst_23 {dimension_numbers = #tpu.dot_dimension_numbers<[1], [0], [0], [1], [0, 0, 1, 1], [], []>} : vector<8x32xf32>, vector<32x32xf32>, vector<8x32xf32> -> vector<8x32xf32>
    %34 = arith.addf %33, %23 : vector<8x32xf32>
    %35 = tpu.reciprocal %34 {approx = true} : vector<8x32xf32> -> vector<8x32xf32>
    %36 = arith.mulf %31, %35 : vector<8x32xf32>
    %c0_24 = arith.constant 0 : index
    %c0_25 = arith.constant 0 : index
    %c0_26 = arith.constant 0 : index
    %37 = vector.load %arg12[%c0_24, %c0_25, %c0_26] : memref<1x8x32xf32, #tpu.memory_space<vmem>>, vector<1x8x32xf32>
    %38 = vector.shape_cast %37 : vector<1x8x32xf32> to vector<8x32xf32>
    %39 = vector.shape_cast %36 : vector<8x32xf32> to vector<1x8x32xf32>
    tpu.vector_store %arg12[%c0_24, %c0_25, %c0_26], %39 {strides = array<i32>} : memref<1x8x32xf32, #tpu.memory_space<vmem>>, vector<1x8x32xf32>,
    %40 = tpu.concatenate %17, %17, %17, %17 in 0 : vector<8x32xf32>, vector<8x32xf32>, vector<8x32xf32>, vector<8x32xf32> -> vector<32x32xf32>
    %c0_27 = arith.constant 0 : index
    %c0_28 = arith.constant 0 : index
    %41 = vector.load %arg8[%c0_27, %c0_28] : memref<32x32xf32, #tpu.memory_space<vmem>>, vector<32x32xf32>
    %42 = arith.mulf %40, %41 : vector<32x32xf32>
    %cst_29 = arith.constant dense<0.000000e+00> : vector<8x32xf32>
    %43 = tpu.matmul %36, %42, %cst_29 {dimension_numbers = #tpu.dot_dimension_numbers<[1], [0], [0], [1], [0, 0, 1, 1], [], []>} : vector<8x32xf32>, vector<32x32xf32>, vector<8x32xf32> -> vector<8x32xf32>
    %c0_30 = arith.constant 0 : index
    %c0_31 = arith.constant 0 : index
    %44 = vector.load %arg3[%c0_30, %c0_31] : memref<32x32xf32, #tpu.memory_space<vmem>>, vector<32x32xf32>
    %cst_32 = arith.constant dense<0.000000e+00> : vector<8x32xf32>
    %45 = tpu.matmul %43, %44, %cst_32 {dimension_numbers = #tpu.dot_dimension_numbers<[1], [0], [0], [1], [0, 0, 1, 1], [], []>} : vector<8x32xf32>, vector<32x32xf32>, vector<8x32xf32> -> vector<8x32xf32>
    %46 = vector.broadcast %5 : vector<1x32xf32> to vector<8x32xf32>
    %47 = arith.addf %45, %46 : vector<8x32xf32>
    %48 = arith.addf %47, %2 : vector<8x32xf32>
    %cst_33 = arith.constant dense<0.000000e+00> : vector<8xf32>
    %49 = vector.multi_reduction <add>, %48, %cst_33 [1] : vector<8x32xf32> to vector<8xf32>
    %50 = vector.shape_cast %49 : vector<8xf32> to vector<8x1xf32>
    %cst_34 = arith.constant 3.200000e+01 : f32
    %51 = vector.broadcast %cst_34 : f32 to vector<8x1xf32>
    %52 = arith.divf %50, %51 : vector<8x1xf32>
    %53 = vector.broadcast %52 : vector<8x1xf32> to vector<8x32xf32>
    %54 = arith.subf %48, %53 : vector<8x32xf32>
    %55 = arith.mulf %54, %54 : vector<8x32xf32>
    %cst_35 = arith.constant dense<0.000000e+00> : vector<8xf32>
    %56 = vector.multi_reduction <add>, %55, %cst_35 [1] : vector<8x32xf32> to vector<8xf32>
    %57 = vector.shape_cast %56 : vector<8xf32> to vector<8x1xf32>
    %cst_36 = arith.constant 3.200000e+01 : f32
    %58 = vector.broadcast %cst_36 : f32 to vector<8x1xf32>
    %59 = arith.divf %57, %58 : vector<8x1xf32>
    %60 = vector.broadcast %52 : vector<8x1xf32> to vector<8x32xf32>
    %61 = arith.subf %48, %60 : vector<8x32xf32>
    %cst_37 = arith.constant 9.99999996E-13 : f32
    %62 = vector.broadcast %cst_37 : f32 to vector<8x1xf32>
    %63 = arith.addf %59, %62 : vector<8x1xf32>
    %64 = math.rsqrt %63 : vector<8x1xf32>
    %65 = vector.broadcast %64 : vector<8x1xf32> to vector<8x32xf32>
    %66 = arith.mulf %61, %65 : vector<8x32xf32>
    %67 = vector.broadcast %7 : vector<1x32xf32> to vector<8x32xf32>
    %68 = arith.mulf %66, %67 : vector<8x32xf32>
    %69 = vector.broadcast %8 : vector<1x32xf32> to vector<8x32xf32>
    %70 = arith.addf %68, %69 : vector<8x32xf32>
    %c0_38 = arith.constant 0 : index
    %c0_39 = arith.constant 0 : index
    %71 = vector.load %arg4[%c0_38, %c0_39] : memref<32x64xf32, #tpu.memory_space<vmem>>, vector<32x64xf32>
    %cst_40 = arith.constant dense<0.000000e+00> : vector<8x64xf32>
    %72 = tpu.matmul %70, %71, %cst_40 {dimension_numbers = #tpu.dot_dimension_numbers<[1], [0], [0], [1], [0, 0, 1, 1], [], []>} : vector<8x32xf32>, vector<32x64xf32>, vector<8x64xf32> -> vector<8x64xf32>
    %73 = vector.broadcast %4 : vector<1x64xf32> to vector<8x64xf32>
    %74 = arith.addf %72, %73 : vector<8x64xf32>
    %cst_41 = arith.constant 5.000000e-01 : f32
    %75 = vector.broadcast %cst_41 : f32 to vector<8x64xf32>
    %76 = arith.mulf %75, %74 : vector<8x64xf32>
    %cst_42 = arith.constant 0.707106769 : f32
    %77 = vector.broadcast %cst_42 : f32 to vector<8x64xf32>
    %78 = arith.mulf %74, %77 : vector<8x64xf32>
    %79 = math.erf %78 : vector<8x64xf32>
    %cst_43 = arith.constant 1.000000e+00 : f32
    %80 = vector.broadcast %cst_43 : f32 to vector<8x64xf32>
    %81 = arith.addf %80, %79 : vector<8x64xf32>
    %82 = arith.mulf %76, %81 : vector<8x64xf32>
    %c0_44 = arith.constant 0 : index
    %c0_45 = arith.constant 0 : index
    %83 = vector.load %arg5[%c0_44, %c0_45] : memref<64x32xf32, #tpu.memory_space<vmem>>, vector<64x32xf32>
    %cst_46 = arith.constant dense<0.000000e+00> : vector<8x32xf32>
    %84 = tpu.matmul %82, %83, %cst_46 {dimension_numbers = #tpu.dot_dimension_numbers<[1], [0], [0], [1], [0, 0, 1, 1], [], []>} : vector<8x64xf32>, vector<64x32xf32>, vector<8x32xf32> -> vector<8x32xf32>
    %85 = vector.broadcast %6 : vector<1x32xf32> to vector<8x32xf32>
    %86 = arith.addf %84, %85 : vector<8x32xf32>
    %87 = arith.addf %86, %70 : vector<8x32xf32>
    %cst_47 = arith.constant dense<0.000000e+00> : vector<8xf32>
    %88 = vector.multi_reduction <add>, %87, %cst_47 [1] : vector<8x32xf32> to vector<8xf32>
    %89 = vector.shape_cast %88 : vector<8xf32> to vector<8x1xf32>
    %cst_48 = arith.constant 3.200000e+01 : f32
    %90 = vector.broadcast %cst_48 : f32 to vector<8x1xf32>
    %91 = arith.divf %89, %90 : vector<8x1xf32>
    %92 = vector.broadcast %91 : vector<8x1xf32> to vector<8x32xf32>
    %93 = arith.subf %87, %92 : vector<8x32xf32>
    %94 = arith.mulf %93, %93 : vector<8x32xf32>
    %cst_49 = arith.constant dense<0.000000e+00> : vector<8xf32>
    %95 = vector.multi_reduction <add>, %94, %cst_49 [1] : vector<8x32xf32> to vector<8xf32>
    %96 = vector.shape_cast %95 : vector<8xf32> to vector<8x1xf32>
    %cst_50 = arith.constant 3.200000e+01 : f32
    %97 = vector.broadcast %cst_50 : f32 to vector<8x1xf32>
    %98 = arith.divf %96, %97 : vector<8x1xf32>
    %99 = vector.broadcast %91 : vector<8x1xf32> to vector<8x32xf32>
    %100 = arith.subf %87, %99 : vector<8x32xf32>
    %cst_51 = arith.constant 9.99999996E-13 : f32
    %101 = vector.broadcast %cst_51 : f32 to vector<8x1xf32>
    %102 = arith.addf %98, %101 : vector<8x1xf32>
    %103 = math.rsqrt %102 : vector<8x1xf32>
    %104 = vector.broadcast %103 : vector<8x1xf32> to vector<8x32xf32>
    %105 = arith.mulf %100, %104 : vector<8x32xf32>
    %106 = vector.broadcast %9 : vector<1x32xf32> to vector<8x32xf32>
    %107 = arith.mulf %105, %106 : vector<8x32xf32>
    %108 = vector.broadcast %10 : vector<1x32xf32> to vector<8x32xf32>
    %109 = arith.addf %107, %108 : vector<8x32xf32>
    %c0_52 = arith.constant 0 : index
    %c0_53 = arith.constant 0 : index
    %c0_54 = arith.constant 0 : index
    %110 = vector.load %arg11[%c0_52, %c0_53, %c0_54] : memref<1x8x32xf32, #tpu.memory_space<vmem>>, vector<1x8x32xf32>
    %111 = vector.shape_cast %110 : vector<1x8x32xf32> to vector<8x32xf32>
    %112 = vector.shape_cast %109 : vector<8x32xf32> to vector<1x8x32xf32>
    tpu.vector_store %arg11[%c0_52, %c0_53, %c0_54], %112 {strides = array<i32>} : memref<1x8x32xf32, #tpu.memory_space<vmem>>, vector<1x8x32xf32>,
    return
  }
  func.func @transform_0(%arg0: i32) -> (i32, i32, i32, i32) {
    %c0_i32 = arith.constant 0 : i32
    %c0_i32_0 = arith.constant 0 : i32
    %c0_i32_1 = arith.constant 0 : i32
    %c0_i32_2 = arith.constant 0 : i32
    return %arg0, %c0_i32, %c0_i32_0, %c0_i32_1 : i32, i32, i32, i32
  }
  func.func @transform_1(%arg0: i32) -> (i32, i32) {
    %c0_i32 = arith.constant 0 : i32
    %c0_i32_0 = arith.constant 0 : i32
    %c0_i32_1 = arith.constant 0 : i32
    return %c0_i32, %c0_i32_0 : i32, i32
  }
  func.func @transform_2(%arg0: i32) -> (i32, i32) {
    %c0_i32 = arith.constant 0 : i32
    %c0_i32_0 = arith.constant 0 : i32
    %c0_i32_1 = arith.constant 0 : i32
    return %c0_i32, %c0_i32_0 : i32, i32
  }
  func.func @transform_3(%arg0: i32) -> (i32, i32) {
    %c0_i32 = arith.constant 0 : i32
    %c0_i32_0 = arith.constant 0 : i32
    %c0_i32_1 = arith.constant 0 : i32
    return %c0_i32, %c0_i32_0 : i32, i32
  }
  func.func @transform_4(%arg0: i32) -> (i32, i32) {
    %c0_i32 = arith.constant 0 : i32
    %c0_i32_0 = arith.constant 0 : i32
    %c0_i32_1 = arith.constant 0 : i32
    return %c0_i32, %c0_i32_0 : i32, i32
  }
  func.func @transform_5(%arg0: i32) -> (i32, i32) {
    %c0_i32 = arith.constant 0 : i32
    %c0_i32_0 = arith.constant 0 : i32
    %c0_i32_1 = arith.constant 0 : i32
    return %c0_i32, %c0_i32_0 : i32, i32
  }
  func.func @transform_6(%arg0: i32) -> (i32, i32) {
    %c0_i32 = arith.constant 0 : i32
    %c0_i32_0 = arith.constant 0 : i32
    %c0_i32_1 = arith.constant 0 : i32
    return %c0_i32, %c0_i32_0 : i32, i32
  }
  func.func @transform_7(%arg0: i32) -> (i32, i32) {
    %c0_i32 = arith.constant 0 : i32
    %c0_i32_0 = arith.constant 0 : i32
    %c0_i32_1 = arith.constant 0 : i32
    return %c0_i32, %c0_i32_0 : i32, i32
  }
  func.func @transform_8(%arg0: i32) -> (i32, i32) {
    %c0_i32 = arith.constant 0 : i32
    %c0_i32_0 = arith.constant 0 : i32
    %c0_i32_1 = arith.constant 0 : i32
    return %c0_i32, %c0_i32_0 : i32, i32
  }
  func.func @transform_9(%arg0: i32) -> (i32, i32) {
    %c0_i32 = arith.constant 0 : i32
    %c0_i32_0 = arith.constant 0 : i32
    %c0_i32_1 = arith.constant 0 : i32
    return %c0_i32, %c0_i32_0 : i32, i32
  }
  func.func @transform_10(%arg0: i32) -> (i32, i32, i32) {
    %c0_i32 = arith.constant 0 : i32
    %c0_i32_0 = arith.constant 0 : i32
    %c0_i32_1 = arith.constant 0 : i32
    return %arg0, %c0_i32, %c0_i32_0 : i32, i32, i32
  }
  func.func @transform_11(%arg0: i32) -> (i32, i32, i32) {
    %c0_i32 = arith.constant 0 : i32
    %c0_i32_0 = arith.constant 0 : i32
    %c0_i32_1 = arith.constant 0 : i32
    return %arg0, %c0_i32, %c0_i32_0 : i32, i32, i32
  }
}

</mosaic_0001>

<llo_original>
// kernel: _forward.1
$region0: #{_forward.1}
  #allocation0 [shape = 'u32[]', space=smem, size = 0x4, offset = 0x4, fixed_abs, tag = 'smem constant byte address 0x4 - core index']
  #allocation1 [shape = 'u32[72,128]{1,0:T(1,128)}', space=vmem, size = 0x9000, scoped, tag = 'internal scratch']
  %s0 = inlined_call_operand.vmem [shape: f32[1,1,8,32], index: 0, kind: input, shape index: {}]
  %s1 = inlined_call_operand.vmem [shape: f32[32,96], index: 1, kind: input, shape index: {}]
  %s2 = inlined_call_operand.vmem [shape: f32[32,32], index: 2, kind: input, shape index: {}]
  %s3 = inlined_call_operand.vmem [shape: f32[32,64], index: 3, kind: input, shape index: {}]
  %s4 = inlined_call_operand.vmem [shape: f32[64,32], index: 4, kind: input, shape index: {}]
  %s5 = inlined_call_operand.hbm [shape: f32[8,128], index: 5, kind: input, shape index: {}]
  %s6 = inlined_call_operand.hbm [shape: f32[32,32], index: 6, kind: input, shape index: {}, may-alias: {6,7,8}]
  %s7 = inlined_call_operand.hbm [shape: f32[32,32], index: 7, kind: input, shape index: {}, may-alias: {6,7,8}]
  %s8 = inlined_call_operand.hbm [shape: f32[32,32], index: 8, kind: input, shape index: {}, may-alias: {6,7,8}]
  %s9 = inlined_call_operand.vmem [shape: f32[8,32], index: 9, kind: input, shape index: {}]
  %s10 = inlined_call_operand.hbm [shape: f32[1,8,32], index: 10, kind: output, shape index: {0}]
  %s11 = inlined_call_operand.vmem [shape: f32[1,8,32], index: 11, kind: output, shape index: {1}]
  %12 = xla_tuple %s10, %s11
  %s13 = sld [smem:[#allocation0]]
  $region74: #{_forward.1} parent=0
    _
  %s15 = ssub.s32 1, %s13
  %s16 = scalar_select 0, %s15, %s13
  $region1: #{_forward.1} parent=0
    #allocation2 [shape = 'u8[4096]{0}', space=vmem, size = 0x1000, scoped, tag = 'input window, operand 5, single buffered']
    #allocation3 [shape = 's32[1]{0}', space=sflag, size = 0x4, scoped, tag = 'scoped memory for _forward.1']
    #allocation4 [shape = 's32[1]{0}', space=sflag, size = 0x4, scoped, tag = 'scoped memory for _forward.1']
    #allocation5 [shape = 'u8[16384]{0}', space=vmem, size = 0x4000, scoped, tag = 'input window, operand 6, single buffered']
    #allocation6 [shape = 's32[1]{0}', space=sflag, size = 0x4, scoped, tag = 'scoped memory for _forward.1']
    #allocation7 [shape = 'u8[16384]{0}', space=vmem, size = 0x4000, scoped, tag = 'input window, operand 7, single buffered']
    #allocation8 [shape = 'u8[16384]{0}', space=vmem, size = 0x4000, scoped, tag = 'input window, operand 8, single buffered']
    #allocation9 [shape = 's32[1]{0}', space=sflag, size = 0x4, scoped, tag = 'scoped memory for _forward.1']
    #allocation10 [shape = 'u8[4096]{0}', space=vmem, size = 0x1000, scoped, tag = 'output window, operand 0, single buffered']
    %17 = vsyncpa [#allocation3], 0
    %18 = vsyncpa [#allocation6], 0
    %19 = vsyncpa [#allocation9], 0
    %20 = vsyncpa [#allocation4], 0
    // Predicated region
    $region2: #{_forward.1} parent=1 // pred_check
      _
    $region3: #{_forward.1} parent=1 // pred_check_branch
      %22 = sbr.rel (0) target = $region5
    $region4: #{_forward.1} parent=1 // pred_region
      _
    $region5: #{_forward.1} parent=1 // pred_fallthru
      _
    // Predicated region
    $region6: #{_forward.1} parent=1 // pred_check
      _
    $region7: #{_forward.1} parent=1 // pred_check_branch
      %24 = sbr.rel (0) target = $region9
    $region8: #{_forward.1} parent=1 // pred_region
      _
    $region9: #{_forward.1} parent=1 // pred_fallthru
      _
    // Predicated region
    $region10: #{_forward.1} parent=1 // pred_check
      _
    $region11: #{_forward.1} parent=1 // pred_check_branch
      %26 = sbr.rel (0) target = $region13
    $region12: #{_forward.1} parent=1 // pred_region
      _
    $region13: #{_forward.1} parent=1 // pred_fallthru
      _
    // Predicated region
    $region14: #{_forward.1} parent=1 // pred_check
      _
    $region15: #{_forward.1} parent=1 // pred_check_branch
      %28 = sbr.rel (0) target = $region17
    $region16: #{_forward.1} parent=1 // pred_region
      _
    $region17: #{_forward.1} parent=1 // pred_fallthru
      _
    // Predicated region
    $region18: #{_forward.1} parent=1 // pred_check
      _
    $region19: #{_forward.1} parent=1 // pred_check_branch
      %30 = sbr.rel (0) target = $region21
    $region20: #{_forward.1} parent=1 // pred_region
      _
    $region21: #{_forward.1} parent=1 // pred_fallthru
      _
    // Predicated region
    $region22: #{_forward.1} parent=1 // pred_check
      _
    $region23: #{_forward.1} parent=1 // pred_check_branch
      %32 = sbr.rel (0) target = $region25
    $region24: #{_forward.1} parent=1 // pred_region
      %34 = vsyncadd [#allocation3], 0
      %s36 = sshll.u32 %s5, 4
      %s37 = int_to_ptr.hbm [resolvable:$true] %s36
      %s38 = sshll.u32 [#allocation2], 4
      %s39 = int_to_ptr.vmem [resolvable:$true] %s38
      %41 = dma.hbm_to_vmem [thread:$0]  %s37, 128, %s39, [#allocation3]
    $region25: #{_forward.1} parent=1 // pred_fallthru
      _
    // Predicated region
    $region26: #{_forward.1} parent=1 // pred_check
      _
    $region27: #{_forward.1} parent=1 // pred_check_branch
      %43 = sbr.rel (0) target = $region29
    $region28: #{_forward.1} parent=1 // pred_region
      %45 = vsyncadd [#allocation6], 0
      %s46 = sshll.u32 %s6, 4
      %s47 = int_to_ptr.hbm [resolvable:$true] %s46
      %s48 = sshll.u32 [#allocation5], 4
      %s49 = int_to_ptr.vmem [resolvable:$true] %s48
      %54 = dma.hbm_to_vmem [thread:$0]  %s47, 512, %s49, [#allocation6], 128, 128, 8
    $region29: #{_forward.1} parent=1 // pred_fallthru
      _
    // Predicated region
    $region30: #{_forward.1} parent=1 // pred_check
      _
    $region31: #{_forward.1} parent=1 // pred_check_branch
      %56 = sbr.rel (0) target = $region33
    $region32: #{_forward.1} parent=1 // pred_region
      %58 = vsyncadd [#allocation6], 0
      %s59 = sshll.u32 %s7, 4
      %s60 = int_to_ptr.hbm [resolvable:$true] %s59
      %s61 = sshll.u32 [#allocation7], 4
      %s62 = int_to_ptr.vmem [resolvable:$true] %s61
      %67 = dma.hbm_to_vmem [thread:$0]  %s60, 512, %s62, [#allocation6], 128, 128, 8
    $region33: #{_forward.1} parent=1 // pred_fallthru
      _
    // Predicated region
    $region34: #{_forward.1} parent=1 // pred_check
      _
    $region35: #{_forward.1} parent=1 // pred_check_branch
      %69 = sbr.rel (0) target = $region37
    $region36: #{_forward.1} parent=1 // pred_region
      %71 = vsyncadd [#allocation9], 0
      %s72 = sshll.u32 %s8, 4
      %s73 = int_to_ptr.hbm [resolvable:$true] %s72
      %s74 = sshll.u32 [#allocation8], 4
      %s75 = int_to_ptr.vmem [resolvable:$true] %s74
      %80 = dma.hbm_to_vmem [thread:$0]  %s73, 512, %s75, [#allocation9], 128, 128, 8
    $region37: #{_forward.1} parent=1 // pred_fallthru
      _
    // Predicated region
    $region38: #{_forward.1} parent=1 // pred_check
      _
    $region39: #{_forward.1} parent=1 // pred_check_branch
      %82 = sbr.rel (0) target = $region41
    $region40: #{_forward.1} parent=1 // pred_region
      _
    $region41: #{_forward.1} parent=1 // pred_fallthru
      _
    // Predicated region
    $region42: #{_forward.1} parent=1 // pred_check
      _
    $region43: #{_forward.1} parent=1 // pred_check_branch
      %84 = sbr.rel (0) target = $region45
    $region44: #{_forward.1} parent=1 // pred_region
      %86 = dma.done [#allocation3], 128
    $region45: #{_forward.1} parent=1 // pred_fallthru
      _
    // Predicated region
    $region46: #{_forward.1} parent=1 // pred_check
      _
    $region47: #{_forward.1} parent=1 // pred_check_branch
      %88 = sbr.rel (0) target = $region49
    $region48: #{_forward.1} parent=1 // pred_region
      %90 = dma.done [#allocation6], 512
    $region49: #{_forward.1} parent=1 // pred_fallthru
      _
    // Predicated region
    $region50: #{_forward.1} parent=1 // pred_check
      _
    $region51: #{_forward.1} parent=1 // pred_check_branch
      %92 = sbr.rel (0) target = $region53
    $region52: #{_forward.1} parent=1 // pred_region
      %94 = dma.done [#allocation6], 512
    $region53: #{_forward.1} parent=1 // pred_fallthru
      _
    // Predicated region
    $region54: #{_forward.1} parent=1 // pred_check
      _
    $region55: #{_forward.1} parent=1 // pred_check_branch
      %96 = sbr.rel (0) target = $region57
    $region56: #{_forward.1} parent=1 // pred_region
      %98 = dma.done [#allocation9], 512
    $region57: #{_forward.1} parent=1 // pred_fallthru
      _
    %v99 = vld [vmem:[%s0] sm:$0xff]
    %v100 = vld [vmem:[#allocation2] sm:$0x1]
    %v101 = vld [vmem:[#allocation2 + $0x1] sm:$0x1]
    %v102 = vld [vmem:[#allocation2 + $0x2] sm:$0x1]
    %v103 = vld [vmem:[#allocation2 + $0x3] sm:$0x1]
    %v104 = vld [vmem:[#allocation2 + $0x4] sm:$0x1]
    %v105 = vld [vmem:[#allocation2 + $0x5] sm:$0x1]
    %v106 = vld [vmem:[#allocation2 + $0x6] sm:$0x1]
    %v107 = vld [vmem:[#allocation2 + $0x7] sm:$0x1]
    %v108 = vld [vmem:[%s1] sm:$0xff]
    %v109 = vld [vmem:[%s1 + $0x8] sm:$0xff]
    %v110 = vld [vmem:[%s1 + $0x10] sm:$0xff]
    %v111 = vld [vmem:[%s1 + $0x18] sm:$0xff]
    %v112 = vperm.slane %v100, 0
    %vm113 = vcmask 261120
    %v115 = vsel %vm113, %v99, 0
    %117 = vmatpush.msra.mxu0 0.0
    %118 = vmatpush.msra.mxu0 0.0
    %119 = vmatpush.msra.mxu0 0.0
    %120 = vmatpush.msra.mxu0 0.0
    %121 = vmatpush.msra.mxu0 0.0
    %122 = vmatpush.msra.mxu0 0.0
    %123 = vmatpush.msra.mxu0 0.0
    %124 = vmatpush.msra.mxu0 0.0
    %125 = vmatpush.msra.mxu0 0.0
    %126 = vmatpush.msra.mxu0 0.0
    %127 = vmatpush.msra.mxu0 0.0
    %128 = vmatpush.msra.mxu0 0.0
    %129 = vmatpush.msra.mxu0 %v111
    %130 = vmatpush.msra.mxu0 %v110
    %131 = vmatpush.msra.mxu0 %v109
    %132 = vmatpush.msra.mxu0 %v108
    %133 = vmatmul.f32.gmra.mxu0 %v115
    %v134 = vpop.f32.mrf.mxu0
    %v135 = vadd.f32 %v112, %v134
    %136 = vdwg.mxu0
    %138 = vrot.lane.b32.xlu0 %v135, 96
    %v139 = vpop.permute.xlu0 %138
    %141 = vxpose.xlu0.b32.start [1/16] %v139, 128
    %142 = vxpose.xlu0.b32.cont [2/16] 0.0, 128
    %143 = vxpose.xlu0.b32.cont [3/16] 0.0, 128
    %144 = vxpose.xlu0.b32.cont [4/16] 0.0, 128
    %145 = vxpose.xlu0.b32.cont [5/16] 0.0, 128
    %146 = vxpose.xlu0.b32.cont [6/16] 0.0, 128
    %147 = vxpose.xlu0.b32.cont [7/16] 0.0, 128
    %148 = vxpose.xlu0.b32.cont [8/16] 0.0, 128
    %149 = vxpose.xlu0.b32.cont [9/16] 0.0, 128
    %150 = vxpose.xlu0.b32.cont [10/16] 0.0, 128
    %151 = vxpose.xlu0.b32.cont [11/16] 0.0, 128
    %152 = vxpose.xlu0.b32.cont [12/16] 0.0, 128
    %153 = vxpose.xlu0.b32.cont [13/16] 0.0, 128
    %154 = vxpose.xlu0.b32.cont [14/16] 0.0, 128
    %155 = vxpose.xlu0.b32.cont [15/16] 0.0, 128
    %156 = vxpose.xlu0.b32.end [16/16] 0.0, 128
    %v157 = vpop.trf.xlu0
    %v158 = vpop.trf.xlu0
    %v159 = vpop.trf.xlu0
    %v160 = vpop.trf.xlu0
    %v161 = vpop.trf.xlu0
    %v162 = vpop.trf.xlu0
    %v163 = vpop.trf.xlu0
    %v164 = vpop.trf.xlu0
    %v165 = vpop.trf.xlu0
    %v166 = vpop.trf.xlu0
    %v167 = vpop.trf.xlu0
    %v168 = vpop.trf.xlu0
    %v169 = vpop.trf.xlu0
    %v170 = vpop.trf.xlu0
    %v171 = vpop.trf.xlu0
    %v172 = vpop.trf.xlu0
    %177 = vrot.lane.b32.xlu0 %v157, 8
    %v178 = vpop.permute.xlu0 %177
    %179 = vrot.lane.b32.xlu0 %v158, 8
    %v180 = vpop.permute.xlu0 %179
    %181 = vrot.lane.b32.xlu0 %v159, 8
    %v182 = vpop.permute.xlu0 %181
    %183 = vrot.lane.b32.xlu0 %v160, 8
    %v184 = vpop.permute.xlu0 %183
    %189 = vrot.lane.b32.xlu0 %v157, 16
    %v190 = vpop.permute.xlu0 %189
    %191 = vrot.lane.b32.xlu0 %v158, 16
    %v192 = vpop.permute.xlu0 %191
    %193 = vrot.lane.b32.xlu0 %v159, 16
    %v194 = vpop.permute.xlu0 %193
    %195 = vrot.lane.b32.xlu0 %v160, 16
    %v196 = vpop.permute.xlu0 %195
    %201 = vrot.lane.b32.xlu0 %v157, 24
    %v202 = vpop.permute.xlu0 %201
    %203 = vrot.lane.b32.xlu0 %v158, 24
    %v204 = vpop.permute.xlu0 %203
    %205 = vrot.lane.b32.xlu0 %v159, 24
    %v206 = vpop.permute.xlu0 %205
    %207 = vrot.lane.b32.xlu0 %v160, 24
    %v208 = vpop.permute.xlu0 %207
    %vm213 = vcmask 64512
    %v214 = vsel %vm213, %v157, %v178
    %v215 = vsel %vm213, %v158, %v180
    %v216 = vsel %vm213, %v159, %v182
    %v217 = vsel %vm213, %v160, %v184
    %vm218 = vcmask 130048
    %v219 = vsel %vm218, %v214, %v190
    %v220 = vsel %vm218, %v215, %v192
    %v221 = vsel %vm218, %v216, %v194
    %v222 = vsel %vm218, %v217, %v196
    %vm223 = vcmask 195584
    %v224 = vsel %vm223, %v219, %v202
    %v225 = vsel %vm223, %v220, %v204
    %v226 = vsel %vm223, %v221, %v206
    %v227 = vsel %vm223, %v222, %v208
    %v228 = vld [vmem:[#allocation5] sm:$0xff]
    %v229 = vld [vmem:[#allocation5 + $0x8] sm:$0xff]
    %v230 = vld [vmem:[#allocation5 + $0x10] sm:$0xff]
    %v231 = vld [vmem:[#allocation5 + $0x18] sm:$0xff]
    %v232 = vmul.f32 %v224, %v228
    %v233 = vmul.f32 %v225, %v229
    %v234 = vmul.f32 %v226, %v230
    %v235 = vmul.f32 %v227, %v231
    %v236 = vsel %vm113, %v135, 0
    %238 = vmatpush.msra.mxu0 0.0
    %239 = vmatpush.msra.mxu0 0.0
    %240 = vmatpush.msra.mxu0 0.0
    %241 = vmatpush.msra.mxu0 0.0
    %242 = vmatpush.msra.mxu0 0.0
    %243 = vmatpush.msra.mxu0 0.0
    %244 = vmatpush.msra.mxu0 0.0
    %245 = vmatpush.msra.mxu0 0.0
    %246 = vmatpush.msra.mxu0 0.0
    %247 = vmatpush.msra.mxu0 0.0
    %248 = vmatpush.msra.mxu0 0.0
    %249 = vmatpush.msra.mxu0 0.0
    %250 = vmatpush.msra.mxu0 %v235
    %251 = vmatpush.msra.mxu0 %v234
    %252 = vmatpush.msra.mxu0 %v233
    %253 = vmatpush.msra.mxu0 %v232
    %254 = vmatmul.f32.gmra.mxu0 %v236
    %v255 = vpop.f32.mrf.mxu0
    %v256 = vadd.f32 0.0, %v255
    %257 = vdwg.mxu0
    %v258 = vld [vmem:[%s9] sm:$0xff]
    %v259 = vmul.f32 %v258, 1e+09
    %v260 = vsub.f32 %v256, %v259
    %v261 = vsel %vm113, %v260, -inf
    %262 = vmax.xlane.f32.xlu0 %v261
    %v263 = vpop.xlane.xlu0 %262
    %v264 = vsub.f32 %v260, %v263
    %v265 = vmul.f32 %v264, 1.442695
    %v266 = vpow.pop %v265
    %v267 = vld [vmem:[#allocation8] sm:$0xff]
    %v268 = vld [vmem:[#allocation8 + $0x8] sm:$0xff]
    %v269 = vld [vmem:[#allocation8 + $0x10] sm:$0xff]
    %v270 = vld [vmem:[#allocation8 + $0x18] sm:$0xff]
    %v272 = vsel %vm113, %v266, 0
    %274 = vmatpush.msra.mxu0 0.0
    %275 = vmatpush.msra.mxu0 0.0
    %276 = vmatpush.msra.mxu0 0.0
    %277 = vmatpush.msra.mxu0 0.0
    %278 = vmatpush.msra.mxu0 0.0
    %279 = vmatpush.msra.mxu0 0.0
    %280 = vmatpush.msra.mxu0 0.0
    %281 = vmatpush.msra.mxu0 0.0
    %282 = vmatpush.msra.mxu0 0.0
    %283 = vmatpush.msra.mxu0 0.0
    %284 = vmatpush.msra.mxu0 0.0
    %285 = vmatpush.msra.mxu0 0.0
    %286 = vmatpush.msra.mxu0 %v270
    %287 = vmatpush.msra.mxu0 %v269
    %288 = vmatpush.msra.mxu0 %v268
    %289 = vmatpush.msra.mxu0 %v267
    %290 = vmatmul.f32.gmra.mxu0 %v272
    %v291 = vpop.f32.mrf.mxu0
    %v292 = vadd.f32 %v258, %v291
    %293 = vdwg.mxu0
    %v294 = vrcp.pop %v292
    %v295 = vmul.f32 %v266, %v294
    %296 = vst.msk [vmem:[%s11] sm:$0xff] %vm113, %v295
    %v297 = vld [vmem:[#allocation7] sm:$0xff]
    %v298 = vld [vmem:[#allocation7 + $0x8] sm:$0xff]
    %v299 = vld [vmem:[#allocation7 + $0x10] sm:$0xff]
    %v300 = vld [vmem:[#allocation7 + $0x18] sm:$0xff]
    %305 = vrot.lane.b32.xlu0 %v297, 64
    %v306 = vpop.permute.xlu0 %305
    %307 = vrot.lane.b32.xlu0 %v298, 64
    %v308 = vpop.permute.xlu0 %307
    %309 = vrot.lane.b32.xlu0 %v299, 64
    %v310 = vpop.permute.xlu0 %309
    %311 = vrot.lane.b32.xlu0 %v300, 64
    %v312 = vpop.permute.xlu0 %311
    %v317 = vmul.f32 %v135, %v306
    %v318 = vmul.f32 %v135, %v308
    %v319 = vmul.f32 %v135, %v310
    %v320 = vmul.f32 %v135, %v312
    %325 = vrot.lane.b32.xlu0 %v317, 64
    %v326 = vpop.permute.xlu0 %325
    %327 = vrot.lane.b32.xlu0 %v318, 64
    %v328 = vpop.permute.xlu0 %327
    %329 = vrot.lane.b32.xlu0 %v319, 64
    %v330 = vpop.permute.xlu0 %329
    %331 = vrot.lane.b32.xlu0 %v320, 64
    %v332 = vpop.permute.xlu0 %331
    %v338 = vsel %vm113, %v295, 0
    %340 = vmatpush.msra.mxu0 0.0
    %341 = vmatpush.msra.mxu0 0.0
    %342 = vmatpush.msra.mxu0 0.0
    %343 = vmatpush.msra.mxu0 0.0
    %344 = vmatpush.msra.mxu0 0.0
    %345 = vmatpush.msra.mxu0 0.0
    %346 = vmatpush.msra.mxu0 0.0
    %347 = vmatpush.msra.mxu0 0.0
    %348 = vmatpush.msra.mxu0 0.0
    %349 = vmatpush.msra.mxu0 0.0
    %350 = vmatpush.msra.mxu0 0.0
    %351 = vmatpush.msra.mxu0 0.0
    %352 = vmatpush.msra.mxu0 %v332
    %353 = vmatpush.msra.mxu0 %v330
    %354 = vmatpush.msra.mxu0 %v328
    %355 = vmatpush.msra.mxu0 %v326
    %356 = vmatmul.f32.gmra.mxu0 %v338
    %v357 = vpop.f32.mrf.mxu0
    %v358 = vadd.f32 0.0, %v357
    %359 = vdwg.mxu0
    %v360 = vld [vmem:[%s2] sm:$0xff]
    %v361 = vld [vmem:[%s2 + $0x8] sm:$0xff]
    %v362 = vld [vmem:[%s2 + $0x10] sm:$0xff]
    %v363 = vld [vmem:[%s2 + $0x18] sm:$0xff]
    %v364 = vperm.slane %v102, 0
    %v366 = vsel %vm113, %v358, 0
    %368 = vmatpush.msra.mxu0 0.0
    %369 = vmatpush.msra.mxu0 0.0
    %370 = vmatpush.msra.mxu0 0.0
    %371 = vmatpush.msra.mxu0 0.0
    %372 = vmatpush.msra.mxu0 0.0
    %373 = vmatpush.msra.mxu0 0.0
    %374 = vmatpush.msra.mxu0 0.0
    %375 = vmatpush.msra.mxu0 0.0
    %376 = vmatpush.msra.mxu0 0.0
    %377 = vmatpush.msra.mxu0 0.0
    %378 = vmatpush.msra.mxu0 0.0
    %379 = vmatpush.msra.mxu0 0.0
    %380 = vmatpush.msra.mxu0 %v363
    %381 = vmatpush.msra.mxu0 %v362
    %382 = vmatpush.msra.mxu0 %v361
    %383 = vmatpush.msra.mxu0 %v360
    %384 = vmatmul.f32.gmra.mxu0 %v366
    %v385 = vpop.f32.mrf.mxu0
    %v386 = vadd.f32 %v364, %v385
    %387 = vdwg.mxu0
    %v388 = vadd.f32 %v386, %v99
    %v389 = vsel %vm113, %v388, 0.0
    %390 = vadd.xlane.f32.xlu0 %v389
    %v391 = vpop.xlane.xlu0 %390
    %v392 = vrcp.pop 32.0
    %v393 = vmul.f32 32.0, %v392
    %v394 = vsub.f32 1.0, %v393
    %v395 = vmul.f32 %v392, %v394
    %v396 = vadd.f32 %v392, %v395
    %vm397 = vweird.f32 %v392
    %v398 = vsel %vm397, %v392, %v396
    %v399 = vmul.f32 %v391, %v398
    %v400 = vsub.f32 %v388, %v399
    %v401 = vmul.f32 %v400, %v400
    %v402 = vsel %vm113, %v401, 0.0
    %403 = vadd.xlane.f32.xlu0 %v402
    %v404 = vpop.xlane.xlu0 %403
    %v405 = vmul.f32 %v404, %v398
    %v406 = vadd.f32 %v405, 1e-12
    %v407 = vrsqrt.pop %v406
    %v408 = vmul.f32 %v407, %v406
    %v409 = vmul.f32 %v408, %v407
    %v410 = vmul.f32 0.5, %v409
    %v411 = vsub.f32 1.5, %v410
    %v412 = vmul.f32 %v407, %v411
    %vm413 = vweird.f32 %v406
    %vm414 = vweird.f32 %v407
    %vm415 = vmor %vm413, %vm414
    %v416 = vsel %vm415, %v407, %v412
    %v417 = vmul.f32 %v400, %v416
    %v418 = vperm.slane %v104, 0
    %v419 = vmul.f32 %v417, %v418
    %v420 = vperm.slane %v105, 0
    %v421 = vadd.f32 %v419, %v420
    %v422 = vld [vmem:[%s3] sm:$0xff]
    %v423 = vld [vmem:[%s3 + $0x8] sm:$0xff]
    %v424 = vld [vmem:[%s3 + $0x10] sm:$0xff]
    %v425 = vld [vmem:[%s3 + $0x18] sm:$0xff]
    %v426 = vperm.slane %v101, 0
    %v428 = vsel %vm113, %v421, 0
    %430 = vmatpush.msra.mxu0 0.0
    %431 = vmatpush.msra.mxu0 0.0
    %432 = vmatpush.msra.mxu0 0.0
    %433 = vmatpush.msra.mxu0 0.0
    %434 = vmatpush.msra.mxu0 0.0
    %435 = vmatpush.msra.mxu0 0.0
    %436 = vmatpush.msra.mxu0 0.0
    %437 = vmatpush.msra.mxu0 0.0
    %438 = vmatpush.msra.mxu0 0.0
    %439 = vmatpush.msra.mxu0 0.0
    %440 = vmatpush.msra.mxu0 0.0
    %441 = vmatpush.msra.mxu0 0.0
    %442 = vmatpush.msra.mxu0 %v425
    %443 = vmatpush.msra.mxu0 %v424
    %444 = vmatpush.msra.mxu0 %v423
    %445 = vmatpush.msra.mxu0 %v422
    %446 = vmatmul.f32.gmra.mxu0 %v428
    %v447 = vpop.f32.mrf.mxu0
    %v448 = vadd.f32 %v426, %v447
    %449 = vdwg.mxu0
    %v450 = vmul.f32 %v448, 0.5
    %v451 = vmul.f32 %v448, 0.70710677
    %v452 = vmul.f32 %v451, %v451
    %v453 = vmin.f32 16.0, %v452
    %v454 = vmul.f32 %v453, 2.1237322e-06
    %v455 = vadd.f32 %v454, 0.00028619796
    %v456 = vmul.f32 %v453, %v455
    %v457 = vadd.f32 %v456, 0.0036580483
    %v458 = vmul.f32 %v453, %v457
    %v459 = vadd.f32 %v458, 0.05243302
    %v460 = vmul.f32 %v453, %v459
    %v461 = vadd.f32 %v460, 0.18741608
    %v462 = vmul.f32 %v453, %v461
    %v463 = vadd.f32 %v462, 1.1283791
    %v464 = vmul.f32 %v451, %v463
    %v465 = vmul.f32 %v453, 3.8918573e-05
    %v466 = vadd.f32 %v465, 0.001143296
    %v467 = vmul.f32 %v453, %v466
    %v468 = vadd.f32 %v467, 0.014752088
    %v469 = vmul.f32 %v453, %v468
    %v470 = vadd.f32 %v469, 0.112945676
    %v471 = vmul.f32 %v453, %v470
    %v472 = vadd.f32 %v471, 0.4994258
    %v473 = vmul.f32 %v453, %v472
    %v474 = vadd.f32 %v473, 1.0
    %v475 = vrcp.pop %v474
    %v476 = vmul.f32 %v474, %v475
    %v477 = vsub.f32 1.0, %v476
    %v478 = vmul.f32 %v475, %v477
    %v479 = vadd.f32 %v475, %v478
    %vm480 = vweird.f32 %v474
    %vm481 = vweird.f32 %v475
    %vm482 = vmor %vm480, %vm481
    %v483 = vsel %vm482, %v475, %v479
    %v484 = vand.u32 2147483647, %v474
    %vm485 = vcmp.eq.f32.partialorder %v484, 8.507059e+37
    %v486 = vand.u32 %v474, 2147483648
    %v487 = vor.u32 1.1754944e-38, %v486
    %v488 = vsel %vm485, %v487, %v483
    %v489 = vmul.f32 %v464, %v488
    %v490 = vmin.f32 %v489, 1.0
    %v491 = vmax.f32 %v490, -1.0
    %v492 = vadd.f32 %v491, 1.0
    %v493 = vmul.f32 %v450, %v492
    %v494 = vld [vmem:[%s4] sm:$0xff]
    %v495 = vld [vmem:[%s4 + $0x8] sm:$0xff]
    %v496 = vld [vmem:[%s4 + $0x10] sm:$0xff]
    %v497 = vld [vmem:[%s4 + $0x18] sm:$0xff]
    %v498 = vld [vmem:[%s4 + $0x20] sm:$0xff]
    %v499 = vld [vmem:[%s4 + $0x28] sm:$0xff]
    %v500 = vld [vmem:[%s4 + $0x30] sm:$0xff]
    %v501 = vld [vmem:[%s4 + $0x38] sm:$0xff]
    %v502 = vperm.slane %v103, 0
    %vm503 = vcmask 523264
    %v505 = vsel %vm503, %v493, 0
    %507 = vmatpush.msra.mxu0 0.0
    %508 = vmatpush.msra.mxu0 0.0
    %509 = vmatpush.msra.mxu0 0.0
    %510 = vmatpush.msra.mxu0 0.0
    %511 = vmatpush.msra.mxu0 0.0
    %512 = vmatpush.msra.mxu0 0.0
    %513 = vmatpush.msra.mxu0 0.0
    %514 = vmatpush.msra.mxu0 0.0
    %515 = vmatpush.msra.mxu0 %v501
    %516 = vmatpush.msra.mxu0 %v500
    %517 = vmatpush.msra.mxu0 %v499
    %518 = vmatpush.msra.mxu0 %v498
    %519 = vmatpush.msra.mxu0 %v497
    %520 = vmatpush.msra.mxu0 %v496
    %521 = vmatpush.msra.mxu0 %v495
    %522 = vmatpush.msra.mxu0 %v494
    %523 = vmatmul.f32.gmra.mxu0 %v505
    %v524 = vpop.f32.mrf.mxu0
    %v525 = vadd.f32 %v502, %v524
    %526 = vdwg.mxu0
    %v527 = vadd.f32 %v525, %v421
    %v528 = vsel %vm113, %v527, 0.0
    %529 = vadd.xlane.f32.xlu0 %v528
    %v530 = vpop.xlane.xlu0 %529
    %v531 = vmul.f32 %v530, %v398
    %v532 = vsub.f32 %v527, %v531
    %v533 = vmul.f32 %v532, %v532
    %v534 = vsel %vm113, %v533, 0.0
    %535 = vadd.xlane.f32.xlu0 %v534
    %v536 = vpop.xlane.xlu0 %535
    %v537 = vmul.f32 %v536, %v398
    %v538 = vadd.f32 %v537, 1e-12
    %v539 = vrsqrt.pop %v538
    %v540 = vmul.f32 %v539, %v538
    %v541 = vmul.f32 %v540, %v539
    %v542 = vmul.f32 0.5, %v541
    %v543 = vsub.f32 1.5, %v542
    %v544 = vmul.f32 %v539, %v543
    %vm545 = vweird.f32 %v538
    %vm546 = vweird.f32 %v539
    %vm547 = vmor %vm545, %vm546
    %v548 = vsel %vm547, %v539, %v544
    %v549 = vmul.f32 %v532, %v548
    %v550 = vperm.slane %v106, 0
    %v551 = vmul.f32 %v549, %v550
    %v552 = vperm.slane %v107, 0
    %v553 = vadd.f32 %v551, %v552
    %554 = vst.msk [vmem:[#allocation10] sm:$0xff] %vm113, %v553
    // Predicated region
    $region58: #{_forward.1} parent=1 // pred_check
      _
    $region59: #{_forward.1} parent=1 // pred_check_branch
      %556 = sbr.rel (0) target = $region61
    $region60: #{_forward.1} parent=1 // pred_region
      %558 = vsyncadd [#allocation4], 0
      %s560 = sshll.u32 [#allocation10], 4
      %s561 = int_to_ptr.vmem [resolvable:$true] %s560
      %s562 = sshll.u32 %s10, 4
      %s563 = int_to_ptr.hbm [resolvable:$true] %s562
      %565 = dma.vmem_to_hbm [thread:$0]  %s561, 128, %s563, [#allocation4]
    $region61: #{_forward.1} parent=1 // pred_fallthru
      _
    // Predicated region
    $region62: #{_forward.1} parent=1 // pred_check
      _
    $region63: #{_forward.1} parent=1 // pred_check_branch
      %567 = sbr.rel (0) target = $region65
    $region64: #{_forward.1} parent=1 // pred_region
      _
    $region65: #{_forward.1} parent=1 // pred_fallthru
      _
    // Predicated region
    $region66: #{_forward.1} parent=1 // pred_check
      _
    $region67: #{_forward.1} parent=1 // pred_check_branch
      %569 = sbr.rel (0) target = $region69
    $region68: #{_forward.1} parent=1 // pred_region
      %571 = dma.done [#allocation4], 128
    $region69: #{_forward.1} parent=1 // pred_fallthru
      _
    // Predicated region
    $region70: #{_forward.1} parent=1 // pred_check
      _
    $region71: #{_forward.1} parent=1 // pred_check_branch
      %573 = sbr.rel (0) target = $region73
    $region72: #{_forward.1} parent=1 // pred_region
      _
    $region73: #{_forward.1} parent=1 // pred_fallthru
      _
    %574 = vsyncpa [#allocation3], 1
    %575 = vsyncpa [#allocation6], 1
    %576 = vsyncpa [#allocation9], 1
    %577 = vsyncpa [#allocation4], 1

</llo_original>
